<compile_context>
chip_gen: v5e
topology: v5e:2x2
jax: 0.10.0
libtpu: 0.0.40
codegen_flags: <defaults>
</compile_context>

<pallas_src>
import jax
import jax.numpy as jnp
import numpy as np
from jax.experimental import pallas as pl
from jax.experimental.pallas import tpu as pltpu


def _round_up(x, m):
    return (x + m - 1) // m * m


def _device_kind():
    try:
        return jax.devices()[0].device_kind.lower()
    except Exception:
        return ""


def _vmem_limit_bytes():
    kind = _device_kind()
    if "v5" in kind or "v6" in kind:
        return 96 * 1024 * 1024      # 128 MiB physical VMEM on v5e/v6e
    return 48 * 1024 * 1024          # v7x has 64 MiB; stay conservative if unknown


def _pick_token_tile(N, S, tn):
    kind = _device_kind()
    if tn is None:
        tn = 1024 if ("v5" in kind or "v6" in kind) else 512
    # Padding-waste guard: every codebook row pads to a multiple of tn, so when
    # tokens-per-row is small keep the tile near the MXU's native row count.
    min_tile = 128 if "v5" in kind else 256
    tn = min(tn, max(min_tile, _round_up(max(N // max(S, 1), 1), 8)))
    return max(8, min(_round_up(tn, 8), _round_up(N, 8)))


# ----------------------------------------------------------------------------
# Training-loss kernel.
# grid = (num_blocks,); every tile holds tokens of a single codebook row
# (grouped/padded in the wrapper).  Scalar-prefetch arrays:
#   gid_ref[b] : codebook row of tile b (drives col_weight/col_bias index_map)
#   cnt_ref[b] : number of real tokens in tile b (0 => padding tile)
#   src_ref[b] : source block for hs/targets (padding tiles repeat the previous
#                real block so the input DMAs dedupe)
# Each tile writes its own (1,1,1) partial sum of (row CE + col CE); the
# wrapper sums the blocks and divides by N.
# ----------------------------------------------------------------------------
def _loss_kernel(gid_ref, cnt_ref, src_ref, hs_ref, rw_ref, rb_ref, cw_ref,
                 cb_ref, rid_ref, cid_ref, out_ref):
    del src_ref  # consumed by the index_maps only
    b = pl.program_id(0)
    cnt = cnt_ref[b]

    @pl.when(cnt == 0)
    def _():
        out_ref[...] = jnp.zeros_like(out_ref)

    @pl.when(cnt > 0)
    def _():
        hs = hs_ref[...]                                         # (tn, D) bf16
        # Valid-token mask: padding tokens carry row id -1, real tokens == gid.
        w = (rid_ref[...] == gid_ref[b]).astype(jnp.float32)    # (tn, 1)

        def masked_ce_sum(logits, tgt_ids):                     # logits (tn,S) f32
            m = jnp.max(logits, axis=-1, keepdims=True)
            lse = m + jnp.log(jnp.sum(jnp.exp(logits - m), axis=-1,
                                      keepdims=True))
            lane = jax.lax.broadcasted_iota(jnp.int32, logits.shape, 1)
            tgt = jnp.sum(jnp.where(lane == tgt_ids, logits, 0.0),
                          axis=-1, keepdims=True)
            return jnp.sum(w * (lse - tgt))

        # Row CE is fully reduced before the col logits are built so only one
        # (tn, S) f32 block is live at a time; the col matmul (MXU) can overlap
        # the row CE's exp/reduce work (EUP/XLU slots).
        row_logits = jnp.dot(hs, rw_ref[...],
                             preferred_element_type=jnp.float32) + rb_ref[...]
        total = masked_ce_sum(row_logits, rid_ref[...])
        col_logits = jnp.dot(hs, cw_ref[...],
                             preferred_element_type=jnp.float32) + cb_ref[...]
        total = total + masked_ce_sum(col_logits, cid_ref[...])
        out_ref[...] = total.reshape(1, 1, 1)


# ----------------------------------------------------------------------------
# Inference kernel 1: row logits for the last hidden state + argmax row.
# bf16 inputs, f32 accumulation (halves weight DMA, full MXU rate).
# ----------------------------------------------------------------------------
def _row_logits_kernel(lh_ref, rw_ref, rb_ref, rowlog_ref, pred_ref):
    logits = jnp.dot(lh_ref[...], rw_ref[...],
                     preferred_element_type=jnp.float32) + rb_ref[...]
    rowlog_ref[...] = logits
    m = jnp.max(logits, axis=-1, keepdims=True)
    lane = jax.lax.broadcasted_iota(jnp.int32, logits.shape, 1)
    big = jnp.int32(logits.shape[-1])
    pred_ref[...] = jnp.min(jnp.where(logits == m, lane, big),
                            axis=-1, keepdims=True)   # first-max argmax


# ----------------------------------------------------------------------------
# Inference kernel 2: column logits of the predicted row only.
# grid=(B,); cw/cb blocks are gathered via a scalar-prefetch index_map; the
# wrapper sorts the batch by predicted row so repeated rows dedupe the DMA.
# ----------------------------------------------------------------------------
def _col_logits_kernel(pred_ref, lh_ref, cw_ref, cb_ref, out_ref):
    del pred_ref  # consumed by the index_maps only
    out_ref[...] = (jnp.dot(lh_ref[...], cw_ref[...],
                            preferred_element_type=jnp.float32) + cb_ref[...])


# ----------------------------------------------------------------------------
# Wrappers
# ----------------------------------------------------------------------------
def lightrnn_loss(hidden_states, target_ids, params, table_size, *, tn=None):
    """Training path: scalar loss = loss_row(mean) + loss_col(sum)/N."""
    B, T, D = hidden_states.shape
    N = B * T
    S = table_size
    tn = _pick_token_tile(N, S, tn)

    hs_flat = hidden_states.reshape(N, D)
    tgt_flat = target_ids.reshape(N)
    row_ids = (tgt_flat // S).astype(jnp.int32)
    col_ids = (tgt_flat % S).astype(jnp.int32)

    # ---- group tokens by codebook row, pad each group to a tile boundary ----
    # TODO(synk): the per-row grouping (argsort + scatter of token slots) has no
    # clean BlockSpec equivalent; it stays as XLA wrapper glue feeding the
    # scalar-prefetch index_maps.  hs is moved with a SINGLE direct scatter
    # (bf16 cast fused in), no intermediate gather pass.
    counts = jnp.bincount(row_ids, length=S).astype(jnp.int32)          # (S,)
    blocks_per_row = (counts + tn - 1) // tn
    row_block_end = jnp.cumsum(blocks_per_row).astype(jnp.int32)
    row_block_start = row_block_end - blocks_per_row
    row_tok_start = (jnp.cumsum(counts) - counts).astype(jnp.int32)
    used_blocks = row_block_end[S - 1]                                   # traced

    num_blocks = max(1, min(N, N // tn + min(S, N)))   # static upper bound
    n_pad = num_blocks * tn

    order = jnp.argsort(row_ids)
    rows_sorted = row_ids[order]
    pos_sorted = (row_block_start[rows_sorted] * tn
                  + (jnp.arange(N, dtype=jnp.int32) - row_tok_start[rows_sorted]))
    dest = jnp.zeros((N,), jnp.int32).at[order].set(pos_sorted)  # slot of token i

    hs_pad = jnp.zeros((n_pad, D), jnp.bfloat16).at[dest].set(
        hs_flat.astype(jnp.bfloat16))
    rid_pad = jnp.full((n_pad, 1), -1, jnp.int32).at[dest, 0].set(row_ids)
    cid_pad = jnp.zeros((n_pad, 1), jnp.int32).at[dest, 0].set(col_ids)

    # Per-block scalars.  Padding blocks (b >= used_blocks) point at the last
    # real block so consecutive identical block indices dedupe their DMAs.
    blk = jnp.arange(num_blocks, dtype=jnp.int32)
    src = jnp.minimum(blk, used_blocks - 1).astype(jnp.int32)
    gid_raw = jnp.minimum(
        jnp.searchsorted(row_block_end, blk, side="right").astype(jnp.int32),
        S - 1)
    gid = gid_raw[src]
    cnt = jnp.clip(counts[gid_raw] - (blk - row_block_start[gid_raw]) * tn, 0, tn)
    cnt = jnp.where(blk < used_blocks, cnt, 0).astype(jnp.int32)

    rw = params["row_w"].astype(jnp.bfloat16)               # (D, S)
    rb = params["row_b"].reshape(1, S).astype(jnp.float32)
    cw = params["col_w"].astype(jnp.bfloat16)               # (S, D, S)
    cb = params["col_b"].reshape(S, 1, S).astype(jnp.float32)

    partial = pl.pallas_call(
        _loss_kernel,
        out_shape=jax.ShapeDtypeStruct((num_blocks, 1, 1), jnp.float32),
        grid_spec=pltpu.PrefetchScalarGridSpec(
            num_scalar_prefetch=3,
            grid=(num_blocks,),
            in_specs=[
                pl.BlockSpec((tn, D), lambda b, g, c, s: (s[b], 0)),   # hs tile
                pl.BlockSpec((D, S), lambda b, g, c, s: (0, 0)),       # row_w resident
                pl.BlockSpec((1, S), lambda b, g, c, s: (0, 0)),       # row_b resident
                pl.BlockSpec((pl.Squeezed(), D, S),
                             lambda b, g, c, s: (g[b], 0, 0)),         # col_w[row(tile)]
                pl.BlockSpec((pl.Squeezed(), 1, S),
                             lambda b, g, c, s: (g[b], 0, 0)),         # col_b[row(tile)]
                pl.BlockSpec((tn, 1), lambda b, g, c, s: (s[b], 0)),   # row targets
                pl.BlockSpec((tn, 1), lambda b, g, c, s: (s[b], 0)),   # col targets
            ],
            out_specs=pl.BlockSpec((1, 1, 1), lambda b, g, c, s: (b, 0, 0)),
        ),
        compiler_params=pltpu.CompilerParams(
            dimension_semantics=("parallel",),     # per-block partial sums
            vmem_limit_bytes=_vmem_limit_bytes()),
    )(gid, cnt, src, hs_pad, rw, rb, cw, cb, rid_pad, cid_pad)
    # Pairwise sum in the wrapper (better accuracy than a single long f32 chain).
    return jnp.sum(partial[:, 0, 0]) / N


def lightrnn_infer(hidden_states, params, table_size):
    """Inference path: returns (row_logits (B,1,S), col_logits (B,1,S))."""
    B, T, D = hidden_states.shape
    S = table_size
    lh = hidden_states[:, -1, :]                             # (B, D) f32
    lh_bf = lh.astype(jnp.bfloat16)
    rw = params["row_w"].astype(jnp.bfloat16)
    rb = params["row_b"].reshape(1, S).astype(jnp.float32)

    # Row logits + predicted row: bf16 inputs, f32 accumulation.
    rowlog, pred = pl.pallas_call(
        _row_logits_kernel,
        out_shape=(jax.ShapeDtypeStruct((B, S), jnp.float32),
                   jax.ShapeDtypeStruct((B, 1), jnp.int32)),
    )(lh_bf, rw, rb)

    # Column logits: gather only col_weight[pred_row] per batch element.  Sort
    # the batch by predicted row so equal rows land on consecutive grid steps
    # and BlockSpec dedupes the col_w DMA; unsort the output afterwards.
    pred_flat = pred.reshape(B)
    order_b = jnp.argsort(pred_flat)
    inv_b = jnp.argsort(order_b)
    pred_sorted = pred_flat[order_b].astype(jnp.int32)
    lh3 = lh_bf[order_b][:, None, :]                         # (B, 1, D) bf16

    cw = params["col_w"].astype(jnp.bfloat16)                # (S, D, S)
    cb = params["col_b"].reshape(S, 1, S).astype(jnp.float32)

    collog_sorted = pl.pallas_call(
        _col_logits_kernel,
        out_shape=jax.ShapeDtypeStruct((B, 1, S), jnp.float32),
        grid_spec=pltpu.PrefetchScalarGridSpec(
            num_scalar_prefetch=1,
            grid=(B,),
            in_specs=[
                pl.BlockSpec((pl.Squeezed(), 1, D), lambda b, p: (b, 0, 0)),
                pl.BlockSpec((pl.Squeezed(), D, S), lambda b, p: (p[b], 0, 0)),
                pl.BlockSpec((pl.Squeezed(), 1, S), lambda b, p: (p[b], 0, 0)),
            ],
            out_specs=pl.BlockSpec((pl.Squeezed(), 1, S),
                                   lambda b, p: (b, 0, 0)),
        ),
        compiler_params=pltpu.CompilerParams(
            dimension_semantics=("parallel",)),   # independent per batch element
    )(pred_sorted, lh3, cw, cb)
    collog = collog_sorted[inv_b]                 # restore original batch order

    return rowlog[:, None, :], collog


# ----------------------------------------------------------------------------
# Pure-JAX references (semantics of the PyTorch module)
# ----------------------------------------------------------------------------
def _ref_loss(params, hidden_states, target_ids, S):
    D = hidden_states.shape[-1]
    hs = hidden_states.reshape(-1, D)
    row = (target_ids // S).reshape(-1)
    col = (target_ids % S).reshape(-1)
    N = hs.shape[0]
    hp = jax.lax.Precision.HIGHEST
    row_logits = jnp.dot(hs, params["row_w"], precision=hp) + params["row_b"]
    lse_r = jax.scipy.special.logsumexp(row_logits, axis=-1)
    tgt_r = jnp.take_along_axis(row_logits, row[:, None], axis=1)[:, 0]
    loss_row_sum = jnp.sum(lse_r - tgt_r)
    cw_g = params["col_w"][row]                              # (N, D, S)
    cb_g = params["col_b"][row]                              # (N, S)
    col_logits = jnp.einsum("nd,nds->ns", hs, cw_g, precision=hp) + cb_g
    lse_c = jax.scipy.special.logsumexp(col_logits, axis=-1)
    tgt_c = jnp.take_along_axis(col_logits, col[:, None], axis=1)[:, 0]
    loss_col_sum = jnp.sum(lse_c - tgt_c)
    return (loss_row_sum + loss_col_sum) / N


def _ref_infer(params, hidden_states, S):
    hp = jax.lax.Precision.HIGHEST
    lh = hidden_states[:, -1, :]
    row_logits = jnp.dot(lh, params["row_w"], precision=hp) + params["row_b"]
    # The kernel's row matmul uses bf16 inputs (f32 accumulation); mirror that
    # quantization for the argmax only, so a near-tie row cannot select a
    # different column table than the kernel.  Logit values themselves are
    # still compared against the full-f32 row_logits above.
    lq = lh.astype(jnp.bfloat16).astype(jnp.float32)
    wq = params["row_w"].astype(jnp.bfloat16).astype(jnp.float32)
    pred = jnp.argmax(jnp.dot(lq, wq, precision=hp) + params["row_b"], axis=-1)
    cw_g = params["col_w"][pred]
    cb_g = params["col_b"][pred]
    col_logits = jnp.einsum("bd,bds->bs", lh, cw_g, precision=hp) + cb_g
    return row_logits[:, None, :], col_logits[:, None, :]


if __name__ == "__main__":
    B, T, D, S = 2, 8, 32, 16
    vocab = S * S

    key = jax.random.PRNGKey(0)
    k1, k2, k3, k4 = jax.random.split(key, 4)
    params = {
        "row_w": (0.02 * jax.random.normal(k1, (D, S))).astype(jnp.float32),
        "row_b": jnp.zeros((S,), jnp.float32),
        "col_w": (0.02 * jax.random.normal(k2, (S, D, S))).astype(jnp.float32),
        "col_b": jnp.zeros((S, S), jnp.float32),
    }
    hidden_states = jax.random.normal(k3, (B, T, D), jnp.float32)
    target_ids = jax.random.randint(k4, (B, T), 0, vocab, jnp.int32)

    # Training path: (None, loss)
    loss = jax.block_until_ready(lightrnn_loss(hidden_states, target_ids, params, S))
    # Inference path: ((last_row_logits, col_logits_last), None)
    rowlog, collog = jax.block_until_ready(lightrnn_infer(hidden_states, params, S))

    # Verify against pure-JAX references (bf16 matmuls -> slightly looser tol).
    loss_ref = _ref_loss(params, hidden_states, target_ids, S)
    rowlog_ref, collog_ref = _ref_infer(params, hidden_states, S)
    np.testing.assert_allclose(np.asarray(loss), np.asarray(loss_ref),
                               rtol=5e-3, atol=5e-3)
    np.testing.assert_allclose(np.asarray(rowlog), np.asarray(rowlog_ref),
                               rtol=5e-3, atol=5e-3)
    np.testing.assert_allclose(np.asarray(collog), np.asarray(collog_ref),
                               rtol=5e-3, atol=5e-3)

    print("KERNEL_OK")
</pallas_src>

<mosaic_0001>
module attributes {stable_mosaic.version = 11 : i64} {
  func.func @_loss_kernel(%arg0: i32, %arg1: memref<16xi32, #tpu.memory_space<smem>>, %arg2: memref<16xi32, #tpu.memory_space<smem>>, %arg3: memref<16xi32, #tpu.memory_space<smem>>, %arg4: memref<16x32xbf16, #tpu.memory_space<vmem>>, %arg5: memref<32x16xbf16, #tpu.memory_space<vmem>>, %arg6: memref<1x16xf32, #tpu.memory_space<vmem>>, %arg7: memref<1x32x16xbf16, #tpu.memory_space<vmem>>, %arg8: memref<1x1x16xf32, #tpu.memory_space<vmem>>, %arg9: memref<16x1xi32, #tpu.memory_space<vmem>>, %arg10: memref<16x1xi32, #tpu.memory_space<vmem>>, %arg11: memref<1x1x1xf32, #tpu.memory_space<vmem>>) attributes {dimension_semantics = [#tpu.dimension_semantics<parallel>], iteration_bounds = array<i64: 16>, scalar_prefetch = 3 : i64, scratch_operands = 0 : i64, tpu.core_type = #tpu.core_type<tc>, window_params = [{transform_indices = @transform_0, window_bounds = array<i64: 16, 32>}, {pipeline_mode = #tpu.pipeline_mode<synchronous>, transform_indices = @transform_1, window_bounds = array<i64: 32, 16>}, {pipeline_mode = #tpu.pipeline_mode<synchronous>, transform_indices = @transform_2, window_bounds = array<i64: 1, 16>}, {transform_indices = @transform_3, window_bounds = array<i64: 1, 32, 16>}, {transform_indices = @transform_4, window_bounds = array<i64: 1, 1, 16>}, {transform_indices = @transform_5, window_bounds = array<i64: 16, 1>}, {transform_indices = @transform_6, window_bounds = array<i64: 16, 1>}, {transform_indices = @transform_7, window_bounds = array<i64: 1, 1, 1>}]} {
    %0 = arith.index_cast %arg0 : i32 to index
    %1 = memref.load %arg2[%0] : memref<16xi32, #tpu.memory_space<smem>>
    %c0_i32 = arith.constant 0 : i32
    %2 = arith.cmpi eq, %1, %c0_i32 : i32
    %3 = arith.extui %2 : i1 to i32
    %c0_i32_0 = arith.constant 0 : i32
    %4 = arith.cmpi ne, %3, %c0_i32_0 : i32
    scf.if %4 {
      %cst = arith.constant 0.000000e+00 : f32
      %8 = vector.broadcast %cst : f32 to vector<1x1x1xf32>
      %c0 = arith.constant 0 : index
      %c0_3 = arith.constant 0 : index
      %c0_4 = arith.constant 0 : index
      %9 = vector.load %arg11[%c0, %c0_3, %c0_4] : memref<1x1x1xf32, #tpu.memory_space<vmem>>, vector<1x1x1xf32>
      tpu.vector_store %arg11[%c0, %c0_3, %c0_4], %8 {strides = array<i32>} : memref<1x1x1xf32, #tpu.memory_space<vmem>>, vector<1x1x1xf32>,
    } else {
    }
    %c0_i32_1 = arith.constant 0 : i32
    %5 = arith.cmpi sgt, %1, %c0_i32_1 : i32
    %6 = arith.extui %5 : i1 to i32
    %c0_i32_2 = arith.constant 0 : i32
    %7 = arith.cmpi ne, %6, %c0_i32_2 : i32
    scf.if %7 {
      %c0 = arith.constant 0 : index
      %c0_3 = arith.constant 0 : index
      %8 = vector.load %arg4[%c0, %c0_3] : memref<16x32xbf16, #tpu.memory_space<vmem>>, vector<16x32xbf16>
      %c0_4 = arith.constant 0 : index
      %c0_5 = arith.constant 0 : index
      %9 = vector.load %arg9[%c0_4, %c0_5] : memref<16x1xi32, #tpu.memory_space<vmem>>, vector<16x1xi32>
      %10 = arith.index_cast %arg0 : i32 to index
      %11 = memref.load %arg1[%10] : memref<16xi32, #tpu.memory_space<smem>>
      %12 = vector.broadcast %11 : i32 to vector<16x1xi32>
      %13 = arith.cmpi eq, %9, %12 : vector<16x1xi32>
      %14 = arith.extui %13 : vector<16x1xi1> to vector<16x1xi32>
      %15 = arith.sitofp %14 : vector<16x1xi32> to vector<16x1xf32>
      %c0_6 = arith.constant 0 : index
      %c0_7 = arith.constant 0 : index
      %16 = vector.load %arg5[%c0_6, %c0_7] : memref<32x16xbf16, #tpu.memory_space<vmem>>, vector<32x16xbf16>
      %cst = arith.constant dense<0.000000e+00> : vector<16x16xf32>
      %17 = tpu.matmul %8, %16, %cst {dimension_numbers = #tpu.dot_dimension_numbers<[1], [0], [0], [1], [0, 0, 1, 1], [], []>} : vector<16x32xbf16>, vector<32x16xbf16>, vector<16x16xf32> -> vector<16x16xf32>
      %c0_8 = arith.constant 0 : index
      %c0_9 = arith.constant 0 : index
      %18 = vector.load %arg6[%c0_8, %c0_9] : memref<1x16xf32, #tpu.memory_space<vmem>>, vector<1x16xf32>
      %19 = vector.broadcast %18 : vector<1x16xf32> to vector<16x16xf32>
      %20 = arith.addf %17, %19 : vector<16x16xf32>
      %c0_10 = arith.constant 0 : index
      %c0_11 = arith.constant 0 : index
      %21 = vector.load %arg9[%c0_10, %c0_11] : memref<16x1xi32, #tpu.memory_space<vmem>>, vector<16x1xi32>
      %cst_12 = arith.constant dense<0xFF800000> : vector<16xf32>
      %22 = vector.multi_reduction <maximumf>, %20, %cst_12 [1] : vector<16x16xf32> to vector<16xf32>
      %23 = vector.shape_cast %22 : vector<16xf32> to vector<16x1xf32>
      %24 = vector.broadcast %23 : vector<16x1xf32> to vector<16x16xf32>
      %25 = arith.subf %20, %24 : vector<16x16xf32>
      %26 = math.exp %25 : vector<16x16xf32>
      %cst_13 = arith.constant dense<0.000000e+00> : vector<16xf32>
      %27 = vector.multi_reduction <add>, %26, %cst_13 [1] : vector<16x16xf32> to vector<16xf32>
      %28 = vector.shape_cast %27 : vector<16xf32> to vector<16x1xf32>
      %29 = math.log %28 : vector<16x1xf32>
      %30 = arith.addf %23, %29 : vector<16x1xf32>
      %31 = tpu.iota {dimensions = array<i32: 1>} : vector<16x16xi32>
      %32 = vector.broadcast %21 : vector<16x1xi32> to vector<16x16xi32>
      %33 = arith.cmpi eq, %31, %32 : vector<16x16xi32>
      %cst_14 = arith.constant 0.000000e+00 : f32
      %34 = vector.broadcast %cst_14 : f32 to vector<16x16xf32>
      %35 = arith.select %33, %20, %34 : vector<16x16xi1>, vector<16x16xf32>
      %cst_15 = arith.constant dense<0.000000e+00> : vector<16xf32>
      %36 = vector.multi_reduction <add>, %35, %cst_15 [1] : vector<16x16xf32> to vector<16xf32>
      %37 = vector.shape_cast %36 : vector<16xf32> to vector<16x1xf32>
      %38 = arith.subf %30, %37 : vector<16x1xf32>
      %39 = arith.mulf %15, %38 : vector<16x1xf32>
      %40 = vector.shape_cast %39 : vector<16x1xf32> to vector<1x16x1xf32>
      %cst_16 = arith.constant dense<0.000000e+00> : vector<1xf32>
      %41 = vector.multi_reduction <add>, %40, %cst_16 [1, 2] : vector<1x16x1xf32> to vector<1xf32>
      %42 = vector.shape_cast %41 : vector<1xf32> to vector<1x1x1xf32>
      %43 = vector.extract %42[0, 0, 0] : f32 from vector<1x1x1xf32>
      %c0_17 = arith.constant 0 : index
      %c0_18 = arith.constant 0 : index
      %c0_19 = arith.constant 0 : index
      %44 = vector.load %arg7[%c0_17, %c0_18, %c0_19] : memref<1x32x16xbf16, #tpu.memory_space<vmem>>, vector<1x32x16xbf16>
      %45 = vector.shape_cast %44 : vector<1x32x16xbf16> to vector<32x16xbf16>
      %cst_20 = arith.constant dense<0.000000e+00> : vector<16x16xf32>
      %46 = tpu.matmul %8, %45, %cst_20 {dimension_numbers = #tpu.dot_dimension_numbers<[1], [0], [0], [1], [0, 0, 1, 1], [], []>} : vector<16x32xbf16>, vector<32x16xbf16>, vector<16x16xf32> -> vector<16x16xf32>
      %c0_21 = arith.constant 0 : index
      %c0_22 = arith.constant 0 : index
      %c0_23 = arith.constant 0 : index
      %47 = vector.load %arg8[%c0_21, %c0_22, %c0_23] : memref<1x1x16xf32, #tpu.memory_space<vmem>>, vector<1x1x16xf32>
      %48 = vector.shape_cast %47 : vector<1x1x16xf32> to vector<1x16xf32>
      %49 = vector.broadcast %48 : vector<1x16xf32> to vector<16x16xf32>
      %50 = arith.addf %46, %49 : vector<16x16xf32>
      %c0_24 = arith.constant 0 : index
      %c0_25 = arith.constant 0 : index
      %51 = vector.load %arg10[%c0_24, %c0_25] : memref<16x1xi32, #tpu.memory_space<vmem>>, vector<16x1xi32>
      %cst_26 = arith.constant dense<0xFF800000> : vector<16xf32>
      %52 = vector.multi_reduction <maximumf>, %50, %cst_26 [1] : vector<16x16xf32> to vector<16xf32>
      %53 = vector.shape_cast %52 : vector<16xf32> to vector<16x1xf32>
      %54 = vector.broadcast %53 : vector<16x1xf32> to vector<16x16xf32>
      %55 = arith.subf %50, %54 : vector<16x16xf32>
      %56 = math.exp %55 : vector<16x16xf32>
      %cst_27 = arith.constant dense<0.000000e+00> : vector<16xf32>
      %57 = vector.multi_reduction <add>, %56, %cst_27 [1] : vector<16x16xf32> to vector<16xf32>
      %58 = vector.shape_cast %57 : vector<16xf32> to vector<16x1xf32>
      %59 = math.log %58 : vector<16x1xf32>
      %60 = arith.addf %53, %59 : vector<16x1xf32>
      %61 = tpu.iota {dimensions = array<i32: 1>} : vector<16x16xi32>
      %62 = vector.broadcast %51 : vector<16x1xi32> to vector<16x16xi32>
      %63 = arith.cmpi eq, %61, %62 : vector<16x16xi32>
      %cst_28 = arith.constant 0.000000e+00 : f32
      %64 = vector.broadcast %cst_28 : f32 to vector<16x16xf32>
      %65 = arith.select %63, %50, %64 : vector<16x16xi1>, vector<16x16xf32>
      %cst_29 = arith.constant dense<0.000000e+00> : vector<16xf32>
      %66 = vector.multi_reduction <add>, %65, %cst_29 [1] : vector<16x16xf32> to vector<16xf32>
      %67 = vector.shape_cast %66 : vector<16xf32> to vector<16x1xf32>
      %68 = arith.subf %60, %67 : vector<16x1xf32>
      %69 = arith.mulf %15, %68 : vector<16x1xf32>
      %70 = vector.shape_cast %69 : vector<16x1xf32> to vector<1x16x1xf32>
      %cst_30 = arith.constant dense<0.000000e+00> : vector<1xf32>
      %71 = vector.multi_reduction <add>, %70, %cst_30 [1, 2] : vector<1x16x1xf32> to vector<1xf32>
      %72 = vector.shape_cast %71 : vector<1xf32> to vector<1x1x1xf32>
      %73 = vector.extract %72[0, 0, 0] : f32 from vector<1x1x1xf32>
      %74 = arith.addf %43, %73 : f32
      %75 = vector.broadcast %74 : f32 to vector<1x1x1xf32>
      %c0_31 = arith.constant 0 : index
      %c0_32 = arith.constant 0 : index
      %c0_33 = arith.constant 0 : index
      %76 = vector.load %arg11[%c0_31, %c0_32, %c0_33] : memref<1x1x1xf32, #tpu.memory_space<vmem>>, vector<1x1x1xf32>
      tpu.vector_store %arg11[%c0_31, %c0_32, %c0_33], %75 {strides = array<i32>} : memref<1x1x1xf32, #tpu.memory_space<vmem>>, vector<1x1x1xf32>,
    } else {
    }
    return
  }
  func.func @transform_0(%arg0: i32, %arg1: memref<16xi32, #tpu.memory_space<smem>>, %arg2: memref<16xi32, #tpu.memory_space<smem>>, %arg3: memref<16xi32, #tpu.memory_space<smem>>) -> (i32, i32) {
    %0 = arith.index_cast %arg0 : i32 to index
    %1 = memref.load %arg3[%0] : memref<16xi32, #tpu.memory_space<smem>>
    %c0_i32 = arith.constant 0 : i32
    %c0_i32_0 = arith.constant 0 : i32
    return %1, %c0_i32 : i32, i32
  }
  func.func @transform_1(%arg0: i32, %arg1: memref<16xi32, #tpu.memory_space<smem>>, %arg2: memref<16xi32, #tpu.memory_space<smem>>, %arg3: memref<16xi32, #tpu.memory_space<smem>>) -> (i32, i32) {
    %c0_i32 = arith.constant 0 : i32
    %c0_i32_0 = arith.constant 0 : i32
    %c0_i32_1 = arith.constant 0 : i32
    return %c0_i32, %c0_i32_0 : i32, i32
  }
  func.func @transform_2(%arg0: i32, %arg1: memref<16xi32, #tpu.memory_space<smem>>, %arg2: memref<16xi32, #tpu.memory_space<smem>>, %arg3: memref<16xi32, #tpu.memory_space<smem>>) -> (i32, i32) {
    %c0_i32 = arith.constant 0 : i32
    %c0_i32_0 = arith.constant 0 : i32
    %c0_i32_1 = arith.constant 0 : i32
    return %c0_i32, %c0_i32_0 : i32, i32
  }
  func.func @transform_3(%arg0: i32, %arg1: memref<16xi32, #tpu.memory_space<smem>>, %arg2: memref<16xi32, #tpu.memory_space<smem>>, %arg3: memref<16xi32, #tpu.memory_space<smem>>) -> (i32, i32, i32) {
    %0 = arith.index_cast %arg0 : i32 to index
    %1 = memref.load %arg1[%0] : memref<16xi32, #tpu.memory_space<smem>>
    %c0_i32 = arith.constant 0 : i32
    %c0_i32_0 = arith.constant 0 : i32
    %c0_i32_1 = arith.constant 0 : i32
    return %1, %c0_i32, %c0_i32_0 : i32, i32, i32
  }
  func.func @transform_4(%arg0: i32, %arg1: memref<16xi32, #tpu.memory_space<smem>>, %arg2: memref<16xi32, #tpu.memory_space<smem>>, %arg3: memref<16xi32, #tpu.memory_space<smem>>) -> (i32, i32, i32) {
    %0 = arith.index_cast %arg0 : i32 to index
    %1 = memref.load %arg1[%0] : memref<16xi32, #tpu.memory_space<smem>>
    %c0_i32 = arith.constant 0 : i32
    %c0_i32_0 = arith.constant 0 : i32
    %c0_i32_1 = arith.constant 0 : i32
    return %1, %c0_i32, %c0_i32_0 : i32, i32, i32
  }
  func.func @transform_5(%arg0: i32, %arg1: memref<16xi32, #tpu.memory_space<smem>>, %arg2: memref<16xi32, #tpu.memory_space<smem>>, %arg3: memref<16xi32, #tpu.memory_space<smem>>) -> (i32, i32) {
    %0 = arith.index_cast %arg0 : i32 to index
    %1 = memref.load %arg3[%0] : memref<16xi32, #tpu.memory_space<smem>>
    %c0_i32 = arith.constant 0 : i32
    %c0_i32_0 = arith.constant 0 : i32
    return %1, %c0_i32 : i32, i32
  }
  func.func @transform_6(%arg0: i32, %arg1: memref<16xi32, #tpu.memory_space<smem>>, %arg2: memref<16xi32, #tpu.memory_space<smem>>, %arg3: memref<16xi32, #tpu.memory_space<smem>>) -> (i32, i32) {
    %0 = arith.index_cast %arg0 : i32 to index
    %1 = memref.load %arg3[%0] : memref<16xi32, #tpu.memory_space<smem>>
    %c0_i32 = arith.constant 0 : i32
    %c0_i32_0 = arith.constant 0 : i32
    return %1, %c0_i32 : i32, i32
  }
  func.func @transform_7(%arg0: i32, %arg1: memref<16xi32, #tpu.memory_space<smem>>, %arg2: memref<16xi32, #tpu.memory_space<smem>>, %arg3: memref<16xi32, #tpu.memory_space<smem>>) -> (i32, i32, i32) {
    %c0_i32 = arith.constant 0 : i32
    %c0_i32_0 = arith.constant 0 : i32
    %c0_i32_1 = arith.constant 0 : i32
    return %arg0, %c0_i32, %c0_i32_0 : i32, i32, i32
  }
}

</mosaic_0001>

<llo_original>
// kernel: tpu_custom_call.1
$region0: #{tpu_custom_call.1}
  #allocation0 [shape = 'u32[]', space=smem, size = 0x4, offset = 0x4, fixed_abs, tag = 'smem constant byte address 0x4 - core index']
  #allocation1 [shape = 'u32[72,128]{1,0:T(1,128)}', space=vmem, size = 0x9000, scoped, tag = 'internal scratch']
  #allocation2 [shape = 's32[1]{0}', space=sflag, size = 0x4, scoped, tag = 'scoped memory for tpu_custom_call.1']
  #allocation3 [shape = 'u8[512]{0}', space=smem, size = 0x200, scoped, tag = 'prefetched SMEM operand 0']
  #allocation4 [shape = 'u8[512]{0}', space=smem, size = 0x200, scoped, tag = 'prefetched SMEM operand 1']
  #allocation5 [shape = 'u8[512]{0}', space=smem, size = 0x200, scoped, tag = 'prefetched SMEM operand 2']
  %s0 = inlined_call_operand.vmem [shape: s32[16], index: 0, kind: input, shape index: {}]
  %s1 = inlined_call_operand.vmem [shape: s32[16], index: 1, kind: input, shape index: {}]
  %s2 = inlined_call_operand.vmem [shape: s32[16], index: 2, kind: input, shape index: {}]
  %s3 = inlined_call_operand.vmem [shape: bf16[256,32], index: 3, kind: input, shape index: {}]
  %s4 = inlined_call_operand.vmem [shape: bf16[32,16], index: 4, kind: input, shape index: {}]
  %s5 = inlined_call_operand.vmem [shape: f32[1,16], index: 5, kind: input, shape index: {}]
  %s6 = inlined_call_operand.vmem [shape: bf16[16,32,16], index: 6, kind: input, shape index: {}]
  %s7 = inlined_call_operand.vmem [shape: f32[16,1,16], index: 7, kind: input, shape index: {}]
  %s8 = inlined_call_operand.vmem [shape: s32[256,1], index: 8, kind: input, shape index: {}]
  %s9 = inlined_call_operand.vmem [shape: s32[256,1], index: 9, kind: input, shape index: {}]
  %s10 = inlined_call_operand.vmem [shape: f32[16,1,1], index: 10, kind: output, shape index: {}]
  %s11 = sld [smem:[#allocation0]]
  $region69: #{tpu_custom_call.1} parent=0
    _
  %s13 = ssub.s32 1, %s11
  %s14 = scalar_select 0, %s13, %s11
  %s16 = sshll.u32 %s0, 4
  %s17 = int_to_ptr.vmem [resolvable:$true] %s16
  %19 = dma.vmem_to_smem %s17, 16, [#allocation3], [#allocation2]
  %s21 = sshll.u32 %s1, 4
  %s22 = int_to_ptr.vmem [resolvable:$true] %s21
  %24 = dma.vmem_to_smem %s22, 16, [#allocation4], [#allocation2]
  %s26 = sshll.u32 %s2, 4
  %s27 = int_to_ptr.vmem [resolvable:$true] %s26
  %29 = dma.vmem_to_smem %s27, 16, [#allocation5], [#allocation2]
  %31 = dma.done [#allocation2], 48
  %32 = sfence
  loop: start=0, step=1, limit=18
  $region2: #{tpu_custom_call.1} parent=0 // loop_pre_header
    _
  $region3: #{tpu_custom_call.1} parent=0 // loop_header
    %s34 = sphi 0, %s38
    %p35 = scmp.ge.s32.totalorder %s34, 18
    %s46 = sphi 0, %s48
    %s49 = sphi 0, %s46
    %s50 = sphi 0, %s49
    %s66 = sphi 0, %s50
    %s70 = sphi 0, %s70
    %s72 = sphi 0, %s70
    %s73 = sphi 0, %s72
    %s87 = sphi 0, %s73
    %s91 = sphi 0, %s91
    %s93 = sphi 0, %s91
    %s94 = sphi 0, %s93
    %s108 = sphi 0, %s94
    %s116 = sphi 0, %s118
    %s119 = sphi 0, %s116
    %s120 = sphi 0, %s119
    %s136 = sphi 0, %s120
    %s144 = sphi 0, %s146
    %s147 = sphi 0, %s144
    %s148 = sphi 0, %s147
    %s164 = sphi 0, %s148
    %s172 = sphi 0, %s174
    %s175 = sphi 0, %s172
    %s176 = sphi 0, %s175
    %s192 = sphi 0, %s176
    %s200 = sphi 0, %s202
    %s203 = sphi 0, %s200
    %s204 = sphi 0, %s203
    %s220 = sphi 0, %s204
    %s226 = sphi 0, %s228
    %s229 = sphi 0, %s226
    %s230 = sphi 0, %s229
    %s246 = sphi 0, %s230
  $region4: #{tpu_custom_call.1} parent=0 // loop_header_branch
    %37 = sbr.rel (%p35) target = $region8
  $region5: #{tpu_custom_call.1} parent=0 // loop_body
    %s39 = ssub.s32 %s34, 1
    %s40 = ssub.s32 %s34, 2
    %s41 = sadd.s32 %s34, 1
    %s42 = sld [smem:[#allocation5 + %s34]]
    %s43 = sld [smem:[#allocation5 + %s41]]
    %s44 = ssub.s32 %s42, %s43
    %p45 = scmp.eq.s32.totalorder %s44, 0
    %s47 = sadd.s32 %s46, 1
    %s48 = scalar_select %p45, %s46, %s47
    %p51 = pneg %p45
    %p52 = scmp.eq.s32.totalorder %s34, 15
    %p53 = por %p51, %p52
    %p54 = scmp.ne.s32.totalorder %s46, %s49
    %p55 = scmp.eq.s32.totalorder %s34, 0
    %p56 = por %p54, %p55
    %p57 = scmp.ne.s32.totalorder %s46, %s49
    %p58 = scmp.eq.s32.totalorder %s39, 15
    %p59 = por %p57, %p58
    %p60 = scmp.ne.s32.totalorder %s49, %s50
    %p61 = scmp.eq.s32.totalorder %s39, 0
    %p62 = por %p60, %p61
    %p63 = scmp.ne.s32.totalorder %s49, %s50
    %p64 = scmp.eq.s32.totalorder %s40, 15
    %p65 = por %p63, %p64
    %p67 = scmp.ne.s32.totalorder %s50, %s66
    %p68 = scmp.eq.s32.totalorder %s40, 0
    %p69 = por %p67, %p68
    %s71 = sadd.s32 %s70, 1
    %p74 = scmp.eq.s32.totalorder %s34, 15
    %p75 = scmp.ne.s32.totalorder %s70, %s72
    %p76 = scmp.eq.s32.totalorder %s34, 0
    %p77 = por %p75, %p76
    %p78 = scmp.ne.s32.totalorder %s70, %s72
    %p79 = scmp.eq.s32.totalorder %s39, 15
    %p80 = por %p78, %p79
    %p81 = scmp.ne.s32.totalorder %s72, %s73
    %p82 = scmp.eq.s32.totalorder %s39, 0
    %p83 = por %p81, %p82
    %p84 = scmp.ne.s32.totalorder %s72, %s73
    %p85 = scmp.eq.s32.totalorder %s40, 15
    %p86 = por %p84, %p85
    %p88 = scmp.ne.s32.totalorder %s73, %s87
    %p89 = scmp.eq.s32.totalorder %s40, 0
    %p90 = por %p88, %p89
    %s92 = sadd.s32 %s91, 1
    %p95 = scmp.eq.s32.totalorder %s34, 15
    %p96 = scmp.ne.s32.totalorder %s91, %s93
    %p97 = scmp.eq.s32.totalorder %s34, 0
    %p98 = por %p96, %p97
    %p99 = scmp.ne.s32.totalorder %s91, %s93
    %p100 = scmp.eq.s32.totalorder %s39, 15
    %p101 = por %p99, %p100
    %p102 = scmp.ne.s32.totalorder %s93, %s94
    %p103 = scmp.eq.s32.totalorder %s39, 0
    %p104 = por %p102, %p103
    %p105 = scmp.ne.s32.totalorder %s93, %s94
    %p106 = scmp.eq.s32.totalorder %s40, 15
    %p107 = por %p105, %p106
    %p109 = scmp.ne.s32.totalorder %s94, %s108
    %p110 = scmp.eq.s32.totalorder %s40, 0
    %p111 = por %p109, %p110
    %s112 = sld [smem:[#allocation3 + %s34]]
    %s113 = sld [smem:[#allocation3 + %s41]]
    %s114 = ssub.s32 %s112, %s113
    %p115 = scmp.eq.s32.totalorder %s114, 0
    %s117 = sadd.s32 %s116, 1
    %s118 = scalar_select %p115, %s116, %s117
    %p121 = pneg %p115
    %p122 = scmp.eq.s32.totalorder %s34, 15
    %p123 = por %p121, %p122
    %p124 = scmp.ne.s32.totalorder %s116, %s119
    %p125 = scmp.eq.s32.totalorder %s34, 0
    %p126 = por %p124, %p125
    %p127 = scmp.ne.s32.totalorder %s116, %s119
    %p128 = scmp.eq.s32.totalorder %s39, 15
    %p129 = por %p127, %p128
    %p130 = scmp.ne.s32.totalorder %s119, %s120
    %p131 = scmp.eq.s32.totalorder %s39, 0
    %p132 = por %p130, %p131
    %p133 = scmp.ne.s32.totalorder %s119, %s120
    %p134 = scmp.eq.s32.totalorder %s40, 15
    %p135 = por %p133, %p134
    %p137 = scmp.ne.s32.totalorder %s120, %s136
    %p138 = scmp.eq.s32.totalorder %s40, 0
    %p139 = por %p137, %p138
    %s140 = sld [smem:[#allocation3 + %s34]]
    %s141 = sld [smem:[#allocation3 + %s41]]
    %s142 = ssub.s32 %s140, %s141
    %p143 = scmp.eq.s32.totalorder %s142, 0
    %s145 = sadd.s32 %s144, 1
    %s146 = scalar_select %p143, %s144, %s145
    %p149 = pneg %p143
    %p150 = scmp.eq.s32.totalorder %s34, 15
    %p151 = por %p149, %p150
    %p152 = scmp.ne.s32.totalorder %s144, %s147
    %p153 = scmp.eq.s32.totalorder %s34, 0
    %p154 = por %p152, %p153
    %p155 = scmp.ne.s32.totalorder %s144, %s147
    %p156 = scmp.eq.s32.totalorder %s39, 15
    %p157 = por %p155, %p156
    %p158 = scmp.ne.s32.totalorder %s147, %s148
    %p159 = scmp.eq.s32.totalorder %s39, 0
    %p160 = por %p158, %p159
    %p161 = scmp.ne.s32.totalorder %s147, %s148
    %p162 = scmp.eq.s32.totalorder %s40, 15
    %p163 = por %p161, %p162
    %p165 = scmp.ne.s32.totalorder %s148, %s164
    %p166 = scmp.eq.s32.totalorder %s40, 0
    %p167 = por %p165, %p166
    %s168 = sld [smem:[#allocation5 + %s34]]
    %s169 = sld [smem:[#allocation5 + %s41]]
    %s170 = ssub.s32 %s168, %s169
    %p171 = scmp.eq.s32.totalorder %s170, 0
    %s173 = sadd.s32 %s172, 1
    %s174 = scalar_select %p171, %s172, %s173
    %p177 = pneg %p171
    %p178 = scmp.eq.s32.totalorder %s34, 15
    %p179 = por %p177, %p178
    %p180 = scmp.ne.s32.totalorder %s172, %s175
    %p181 = scmp.eq.s32.totalorder %s34, 0
    %p182 = por %p180, %p181
    %p183 = scmp.ne.s32.totalorder %s172, %s175
    %p184 = scmp.eq.s32.totalorder %s39, 15
    %p185 = por %p183, %p184
    %p186 = scmp.ne.s32.totalorder %s175, %s176
    %p187 = scmp.eq.s32.totalorder %s39, 0
    %p188 = por %p186, %p187
    %p189 = scmp.ne.s32.totalorder %s175, %s176
    %p190 = scmp.eq.s32.totalorder %s40, 15
    %p191 = por %p189, %p190
    %p193 = scmp.ne.s32.totalorder %s176, %s192
    %p194 = scmp.eq.s32.totalorder %s40, 0
    %p195 = por %p193, %p194
    %s196 = sld [smem:[#allocation5 + %s34]]
    %s197 = sld [smem:[#allocation5 + %s41]]
    %s198 = ssub.s32 %s196, %s197
    %p199 = scmp.eq.s32.totalorder %s198, 0
    %s201 = sadd.s32 %s200, 1
    %s202 = scalar_select %p199, %s200, %s201
    %p205 = pneg %p199
    %p206 = scmp.eq.s32.totalorder %s34, 15
    %p207 = por %p205, %p206
    %p208 = scmp.ne.s32.totalorder %s200, %s203
    %p209 = scmp.eq.s32.totalorder %s34, 0
    %p210 = por %p208, %p209
    %p211 = scmp.ne.s32.totalorder %s200, %s203
    %p212 = scmp.eq.s32.totalorder %s39, 15
    %p213 = por %p211, %p212
    %p214 = scmp.ne.s32.totalorder %s203, %s204
    %p215 = scmp.eq.s32.totalorder %s39, 0
    %p216 = por %p214, %p215
    %p217 = scmp.ne.s32.totalorder %s203, %s204
    %p218 = scmp.eq.s32.totalorder %s40, 15
    %p219 = por %p217, %p218
    %p221 = scmp.ne.s32.totalorder %s204, %s220
    %p222 = scmp.eq.s32.totalorder %s40, 0
    %p223 = por %p221, %p222
    %s224 = ssub.s32 %s34, %s41
    %p225 = scmp.eq.s32.totalorder %s224, 0
    %s227 = sadd.s32 %s226, 1
    %s228 = scalar_select %p225, %s226, %s227
    %p231 = pneg %p225
    %p232 = scmp.eq.s32.totalorder %s34, 15
    %p233 = por %p231, %p232
    %p234 = scmp.ne.s32.totalorder %s226, %s229
    %p235 = scmp.eq.s32.totalorder %s34, 0
    %p236 = por %p234, %p235
    %p237 = scmp.ne.s32.totalorder %s226, %s229
    %p238 = scmp.eq.s32.totalorder %s39, 15
    %p239 = por %p237, %p238
    %p240 = scmp.ne.s32.totalorder %s229, %s230
    %p241 = scmp.eq.s32.totalorder %s39, 0
    %p242 = por %p240, %p241
    %p243 = scmp.ne.s32.totalorder %s229, %s230
    %p244 = scmp.eq.s32.totalorder %s40, 15
    %p245 = por %p243, %p244
    %p247 = scmp.ne.s32.totalorder %s230, %s246
    %p248 = scmp.eq.s32.totalorder %s40, 0
    %p249 = por %p247, %p248
    %p250 = scmp.le.s32.totalorder 1, %s34
    %p251 = scmp.lt.s32.totalorder %s34, 17
    %p252 = pnand %p250, %p251
    %p253 = pneg %p252
    // Predicated region
    $region9: #{tpu_custom_call.1} parent=5 // pred_check
      _
    $region10: #{tpu_custom_call.1} parent=5 // pred_check_branch
      %255 = sbr.rel (%p252) target = $region12
    $region11: #{tpu_custom_call.1} parent=5 // pred_region
      %s256 = ssub.s32 %s34, 1
      // Predicated region
      $region13: #{tpu_custom_call.1} parent=11 // pred_check
        %p257 = pneg %p83
      $region14: #{tpu_custom_call.1} parent=11 // pred_check_branch
        %259 = sbr.rel (%p257) target = $region16
      $region15: #{tpu_custom_call.1} parent=11 // pred_region
        _
      $region16: #{tpu_custom_call.1} parent=11 // pred_fallthru
        _
      // Predicated region
      $region17: #{tpu_custom_call.1} parent=11 // pred_check
        %p260 = pneg %p104
      $region18: #{tpu_custom_call.1} parent=11 // pred_check_branch
        %262 = sbr.rel (%p260) target = $region20
      $region19: #{tpu_custom_call.1} parent=11 // pred_region
        _
      $region20: #{tpu_custom_call.1} parent=11 // pred_fallthru
        _
    $region12: #{tpu_custom_call.1} parent=5 // pred_fallthru
      _
    %p263 = scmp.lt.s32.totalorder %s34, 16
    // Predicated region
    $region21: #{tpu_custom_call.1} parent=5 // pred_check
      %p264 = pneg %p263
    $region22: #{tpu_custom_call.1} parent=5 // pred_check_branch
      %266 = sbr.rel (%p264) target = $region24
    $region23: #{tpu_custom_call.1} parent=5 // pred_region
      // Predicated region
      $region25: #{tpu_custom_call.1} parent=23 // pred_check
        %p267 = pneg %p56
      $region26: #{tpu_custom_call.1} parent=23 // pred_check_branch
        %269 = sbr.rel (%p267) target = $region28
      $region27: #{tpu_custom_call.1} parent=23 // pred_region
        %s270 = sld [smem:[#allocation5 + %s34]]
        %s271 = smul.u32 2, %s270
        %p272 = scmp.lt.s32.totalorder %s271, 31
        %s273 = scalar_select %p272, %s271, 31
        %s274 = smul.addr %s273, 4
        %s275 = scalar_lea.vmem %s3, %s274
        %s276 = sld [smem:[#allocation5 + %s34]]
        %s277 = smul.u32 2, %s276
      $region28: #{tpu_custom_call.1} parent=23 // pred_fallthru
        _
      // Predicated region
      $region29: #{tpu_custom_call.1} parent=23 // pred_check
        %p278 = pneg %p126
      $region30: #{tpu_custom_call.1} parent=23 // pred_check_branch
        %280 = sbr.rel (%p278) target = $region32
      $region31: #{tpu_custom_call.1} parent=23 // pred_region
        %s281 = sld [smem:[#allocation3 + %s34]]
        %p282 = scmp.lt.s32.totalorder %s281, 15
        %s283 = scalar_select %p282, %s281, 15
        %s284 = smul.addr %s283, 4
        %s285 = smul.addr %s284, 4
        %s286 = scalar_lea.vmem %s6, %s285
        %s287 = sld [smem:[#allocation3 + %s34]]
      $region32: #{tpu_custom_call.1} parent=23 // pred_fallthru
        _
      // Predicated region
      $region33: #{tpu_custom_call.1} parent=23 // pred_check
        %p288 = pneg %p154
      $region34: #{tpu_custom_call.1} parent=23 // pred_check_branch
        %290 = sbr.rel (%p288) target = $region36
      $region35: #{tpu_custom_call.1} parent=23 // pred_region
        %s291 = sld [smem:[#allocation3 + %s34]]
        %p292 = scmp.lt.s32.totalorder %s291, 15
        %s293 = scalar_select %p292, %s291, 15
        %s294 = scalar_lea.vmem %s7, %s293
        %s295 = sld [smem:[#allocation3 + %s34]]
      $region36: #{tpu_custom_call.1} parent=23 // pred_fallthru
        _
      // Predicated region
      $region37: #{tpu_custom_call.1} parent=23 // pred_check
        %p296 = pneg %p182
      $region38: #{tpu_custom_call.1} parent=23 // pred_check_branch
        %298 = sbr.rel (%p296) target = $region40
      $region39: #{tpu_custom_call.1} parent=23 // pred_region
        %s299 = sld [smem:[#allocation5 + %s34]]
        %s300 = smul.u32 2, %s299
        %p301 = scmp.lt.s32.totalorder %s300, 31
        %s302 = scalar_select %p301, %s300, 31
        %s303 = smul.addr %s302, 8
        %s304 = scalar_lea.vmem %s8, %s303
        %s305 = sld [smem:[#allocation5 + %s34]]
        %s306 = smul.u32 2, %s305
      $region40: #{tpu_custom_call.1} parent=23 // pred_fallthru
        _
      // Predicated region
      $region41: #{tpu_custom_call.1} parent=23 // pred_check
        %p307 = pneg %p210
      $region42: #{tpu_custom_call.1} parent=23 // pred_check_branch
        %309 = sbr.rel (%p307) target = $region44
      $region43: #{tpu_custom_call.1} parent=23 // pred_region
        %s310 = sld [smem:[#allocation5 + %s34]]
        %s311 = smul.u32 2, %s310
        %p312 = scmp.lt.s32.totalorder %s311, 31
        %s313 = scalar_select %p312, %s311, 31
        %s314 = smul.addr %s313, 8
        %s315 = scalar_lea.vmem %s9, %s314
        %s316 = sld [smem:[#allocation5 + %s34]]
        %s317 = smul.u32 2, %s316
      $region44: #{tpu_custom_call.1} parent=23 // pred_fallthru
        _
    $region24: #{tpu_custom_call.1} parent=5 // pred_fallthru
      _
    %p318 = scmp.le.s32.totalorder 1, %s34
    %p319 = scmp.lt.s32.totalorder %s34, 17
    %p320 = pnand %p318, %p319
    %p321 = pneg %p320
    // Predicated region
    $region45: #{tpu_custom_call.1} parent=5 // pred_check
      _
    $region46: #{tpu_custom_call.1} parent=5 // pred_check_branch
      %323 = sbr.rel (%p320) target = $region48
    $region47: #{tpu_custom_call.1} parent=5 // pred_region
      %s324 = ssub.s32 %s34, 1
      %s325 = sld [smem:[#allocation5 + %s39]]
      %s326 = smul.u32 2, %s325
      %p327 = scmp.lt.s32.totalorder %s326, 31
      %s328 = scalar_select %p327, %s326, 31
      %s329 = smul.addr %s328, 4
      %s330 = scalar_lea.vmem %s3, %s329
      %p331 = pneg %p62
      %p332 = pneg %p59
      %p333 = pneg %p83
      %p334 = pneg %p80
      %p335 = pneg %p104
      %p336 = pneg %p101
      %s337 = sld [smem:[#allocation3 + %s39]]
      %p338 = scmp.lt.s32.totalorder %s337, 15
      %s339 = scalar_select %p338, %s337, 15
      %s340 = smul.addr %s339, 4
      %s341 = smul.addr %s340, 4
      %s342 = scalar_lea.vmem %s6, %s341
      %p343 = pneg %p132
      %p344 = pneg %p129
      %s345 = sld [smem:[#allocation3 + %s39]]
      %p346 = scmp.lt.s32.totalorder %s345, 15
      %s347 = scalar_select %p346, %s345, 15
      %s348 = scalar_lea.vmem %s7, %s347
      %p349 = pneg %p160
      %p350 = pneg %p157
      %s351 = sld [smem:[#allocation5 + %s39]]
      %s352 = smul.u32 2, %s351
      %p353 = scmp.lt.s32.totalorder %s352, 31
      %s354 = scalar_select %p353, %s352, 31
      %s355 = smul.addr %s354, 8
      %s356 = scalar_lea.vmem %s8, %s355
      %p357 = pneg %p188
      %p358 = pneg %p185
      %s359 = sld [smem:[#allocation5 + %s39]]
      %s360 = smul.u32 2, %s359
      %p361 = scmp.lt.s32.totalorder %s360, 31
      %s362 = scalar_select %p361, %s360, 31
      %s363 = smul.addr %s362, 8
      %s364 = scalar_lea.vmem %s9, %s363
      %p365 = pneg %p216
      %p366 = pneg %p213
      %p367 = pneg %p242
      %p368 = pneg %p239
      %p369 = scmp.lt.s32.totalorder %s39, 15
      %s370 = scalar_select %p369, %s39, 15
      %s371 = scalar_lea.vmem %s10, %s370
      %s372 = sld [smem:[#allocation5 + %s39]]
      %s373 = smul.u32 2, %s372
      %p374 = scmp.lt.s32.totalorder %s373, 31
      %s375 = scalar_select %p374, %s373, 31
      %s376 = smul.addr %s375, 4
      %s377 = scalar_lea.vmem %s3, %s376
      %s378 = sld [smem:[#allocation5 + %s39]]
      %s379 = smul.u32 2, %s378
      %s380 = sld [smem:[#allocation3 + %s39]]
      %p381 = scmp.lt.s32.totalorder %s380, 15
      %s382 = scalar_select %p381, %s380, 15
      %s383 = smul.addr %s382, 4
      %s384 = smul.addr %s383, 4
      %s385 = scalar_lea.vmem %s6, %s384
      %s386 = sld [smem:[#allocation3 + %s39]]
      %s387 = sld [smem:[#allocation3 + %s39]]
      %p388 = scmp.lt.s32.totalorder %s387, 15
      %s389 = scalar_select %p388, %s387, 15
      %s390 = scalar_lea.vmem %s7, %s389
      %s391 = sld [smem:[#allocation3 + %s39]]
      %s392 = sld [smem:[#allocation5 + %s39]]
      %s393 = smul.u32 2, %s392
      %p394 = scmp.lt.s32.totalorder %s393, 31
      %s395 = scalar_select %p394, %s393, 31
      %s396 = smul.addr %s395, 8
      %s397 = scalar_lea.vmem %s8, %s396
      %s398 = sld [smem:[#allocation5 + %s39]]
      %s399 = smul.u32 2, %s398
      %s400 = sld [smem:[#allocation5 + %s39]]
      %s401 = smul.u32 2, %s400
      %p402 = scmp.lt.s32.totalorder %s401, 31
      %s403 = scalar_select %p402, %s401, 31
      %s404 = smul.addr %s403, 8
      %s405 = scalar_lea.vmem %s9, %s404
      %s406 = sld [smem:[#allocation5 + %s39]]
      %s407 = smul.u32 2, %s406
      %p408 = scmp.lt.s32.totalorder %s39, 15
      %s409 = scalar_select %p408, %s39, 15
      %s410 = scalar_lea.vmem %s10, %s409
      %s412 = sld [smem:[#allocation4 + %s39]]
      %p413 = scmp.eq.s32.totalorder %s412, 0
      // Predicated region
      $region49: #{tpu_custom_call.1} parent=47 // pred_check
        %p414 = pneg %p413
      $region50: #{tpu_custom_call.1} parent=47 // pred_check_branch
        %416 = sbr.rel (%p414) target = $region52
      $region51: #{tpu_custom_call.1} parent=47 // pred_region
        %vm417 = vcmask 0
        %418 = vst.msk [vmem:[%s410] sm:$0x1] %vm417, 0.0
      $region52: #{tpu_custom_call.1} parent=47 // pred_fallthru
        _
      %p419 = scmp.gt.s32.totalorder %s412, 0
      // Predicated region
      $region53: #{tpu_custom_call.1} parent=47 // pred_check
        %p420 = pneg %p419
      $region54: #{tpu_custom_call.1} parent=47 // pred_check_branch
        %422 = sbr.rel (%p420) target = $region56
      $region55: #{tpu_custom_call.1} parent=47 // pred_region
        %v423 = vld [vmem:[%s377] sm:$0xf]
        %v424 = vld [vmem:[%s377 + $0x4] sm:$0xf]
        %v425 = vld [vmem:[%s397] sm:$0xff]
        %v426 = vld [vmem:[%s397 + $0x8] sm:$0xff]
        %s427 = sld [smem:[#allocation3 + %s39]]
        %v428 = vstv %s427
        %vm429 = vcmp.eq.s32.totalorder %v425, %v428
        %vm430 = vcmp.eq.s32.totalorder %v426, %v428
        %v431 = vsel %vm429, 1, 0
        %v432 = vsel %vm430, 1, 0
        %v433 = vcvt.s32.f32 %v431
        %v434 = vcvt.s32.f32 %v432
        %v435 = vld [vmem:[%s4] sm:$0xf]
        %v436 = vld [vmem:[%s4 + $0x4] sm:$0xf]
        %v437 = vld [vmem:[%s4 + $0x8] sm:$0xf]
        %v438 = vld [vmem:[%s4 + $0xc] sm:$0xf]
        %v439 = vld [vmem:[%s5] sm:$0x1]
        %v441 = vperm.slane %v439, 0
        %v445 = vunpack.c.l.b16 %v423
        %v446 = vunpack.c.l.b16 %v424
        %v447 = vpack.c.b16 %v446, %v445
        %v452 = vunpack.c.l.b16 %v435
        %v453 = vunpack.c.l.b16 %v436
        %v454 = vunpack.c.l.b16 %v437
        %v455 = vunpack.c.l.b16 %v438
        %v456 = vpack.c.b16 %v453, %v452
        %v457 = vpack.c.b16 %v455, %v454
        %vm460 = vcmask 261120
        %v462 = vsel %vm460, %v447, 0
        %464 = vmatpush.bf16.msra.mxu0 0
        %465 = vmatpush.bf16.msra.mxu0 0
        %466 = vmatpush.bf16.msra.mxu0 0
        %467 = vmatpush.bf16.msra.mxu0 0
        %468 = vmatpush.bf16.msra.mxu0 0
        %469 = vmatpush.bf16.msra.mxu0 0
        %470 = vmatpush.bf16.msra.mxu0 %v457
        %471 = vmatpush.bf16.msra.mxu0 %v456
        %472 = vmatmul.bf16.gmra.mxu0 %v462
        %v473 = vpop.f32.mrf.mxu0
        %v474 = vadd.f32 %v441, %v473
        %v475 = vpop.f32.mrf.mxu0
        %v476 = vadd.f32 %v441, %v475
        %477 = vdwg.mxu0
        %vm478 = vcmask 130048
        %v479 = vsel %vm478, %v474, -inf
        %480 = vmax.xlane.f32.xlu0 %v479
        %v481 = vpop.xlane.xlu0 %480
        %v482 = vsel %vm478, %v476, -inf
        %483 = vmax.xlane.f32.xlu0 %v482
        %v484 = vpop.xlane.xlu0 %483
        %v485 = vsub.f32 %v474, %v481
        %v486 = vsub.f32 %v476, %v484
        %v487 = vmul.f32 %v485, 1.442695
        %v488 = vpow.pop %v487
        %v489 = vmul.f32 %v486, 1.442695
        %v490 = vpow.pop %v489
        %v491 = vsel %vm478, %v488, 0.0
        %492 = vadd.xlane.f32.xlu0 %v491
        %v493 = vpop.xlane.xlu0 %492
        %v494 = vsel %vm478, %v490, 0.0
        %495 = vadd.xlane.f32.xlu0 %v494
        %v496 = vpop.xlane.xlu0 %495
        %v497 = vlog2.pop %v493
        %v498 = vmul.f32 %v497, 0.6931472
        %v499 = vlog2.pop %v496
        %v500 = vmul.f32 %v499, 0.6931472
        %v501 = vadd.f32 %v481, %v498
        %v502 = vadd.f32 %v484, %v500
        %v503 = vlaneseq
        %v504 = vand.u32 %v503, 127
        %505 = vset.pattern.permute.xlu0 0
        %506 = vperm.xlu0 %505, %v425
        %v507 = vpop.permute.xlu0 %506
        %508 = vset.pattern.permute.xlu0 0
        %509 = vperm.xlu0 %508, %v426
        %v510 = vpop.permute.xlu0 %509
        %vm511 = vcmp.eq.s32.totalorder %v504, %v507
        %vm512 = vcmp.eq.s32.totalorder %v504, %v510
        %v513 = vsel %vm511, %v474, 0.0
        %v514 = vsel %vm512, %v476, 0.0
        %v515 = vsel %vm478, %v513, 0.0
        %516 = vadd.xlane.f32.xlu0 %v515
        %v517 = vpop.xlane.xlu0 %516
        %v518 = vsel %vm478, %v514, 0.0
        %519 = vadd.xlane.f32.xlu0 %v518
        %v520 = vpop.xlane.xlu0 %519
        %v521 = vsub.f32 %v501, %v517
        %v522 = vsub.f32 %v502, %v520
        %v523 = vmul.f32 %v433, %v521
        %v524 = vmul.f32 %v434, %v522
        %vm525 = vcmask 7168
        %v526 = vsel %vm525, %v523, 0.0
        %v527 = vsel %vm525, %v524, 0.0
        %v528 = vadd.f32 %v526, %v527
        %529 = vadd.xlane.f32.xlu0 %v528
        %v530 = vpop.xlane.xlu0 %529
        %v531 = vrot.slane %v530, 4
        %v532 = vadd.f32 %v530, %v531
        %v533 = vrot.slane %v532, 2
        %v534 = vadd.f32 %v532, %v533
        %v535 = vrot.slane %v534, 1
        %v536 = vadd.f32 %v534, %v535
        %s537 = vtos %v536
        %v538 = vld [vmem:[%s385] sm:$0xf]
        %v539 = vld [vmem:[%s385 + $0x4] sm:$0xf]
        %v540 = vld [vmem:[%s385 + $0x8] sm:$0xf]
        %v541 = vld [vmem:[%s385 + $0xc] sm:$0xf]
        %v542 = vld [vmem:[%s390] sm:$0x1]
        %v544 = vperm.slane %v542, 0
        %v550 = vunpack.c.l.b16 %v538
        %v551 = vunpack.c.l.b16 %v539
        %v552 = vunpack.c.l.b16 %v540
        %v553 = vunpack.c.l.b16 %v541
        %v554 = vpack.c.b16 %v551, %v550
        %v555 = vpack.c.b16 %v553, %v552
        %558 = vmatpush.bf16.msra.mxu0 0
        %559 = vmatpush.bf16.msra.mxu0 0
        %560 = vmatpush.bf16.msra.mxu0 0
        %561 = vmatpush.bf16.msra.mxu0 0
        %562 = vmatpush.bf16.msra.mxu0 0
        %563 = vmatpush.bf16.msra.mxu0 0
        %564 = vmatpush.bf16.msra.mxu0 %v555
        %565 = vmatpush.bf16.msra.mxu0 %v554
        %566 = vmatmul.bf16.gmra.mxu0 %v462
        %v567 = vpop.f32.mrf.mxu0
        %v568 = vadd.f32 %v544, %v567
        %v569 = vpop.f32.mrf.mxu0
        %v570 = vadd.f32 %v544, %v569
        %571 = vdwg.mxu0
        %v572 = vld [vmem:[%s405] sm:$0xff]
        %v573 = vld [vmem:[%s405 + $0x8] sm:$0xff]
        %v574 = vsel %vm478, %v568, -inf
        %575 = vmax.xlane.f32.xlu0 %v574
        %v576 = vpop.xlane.xlu0 %575
        %v577 = vsel %vm478, %v570, -inf
        %578 = vmax.xlane.f32.xlu0 %v577
        %v579 = vpop.xlane.xlu0 %578
        %v580 = vsub.f32 %v568, %v576
        %v581 = vsub.f32 %v570, %v579
        %v582 = vmul.f32 %v580, 1.442695
        %v583 = vpow.pop %v582
        %v584 = vmul.f32 %v581, 1.442695
        %v585 = vpow.pop %v584
        %v586 = vsel %vm478, %v583, 0.0
        %587 = vadd.xlane.f32.xlu0 %v586
        %v588 = vpop.xlane.xlu0 %587
        %v589 = vsel %vm478, %v585, 0.0
        %590 = vadd.xlane.f32.xlu0 %v589
        %v591 = vpop.xlane.xlu0 %590
        %v592 = vlog2.pop %v588
        %v593 = vmul.f32 %v592, 0.6931472
        %v594 = vlog2.pop %v591
        %v595 = vmul.f32 %v594, 0.6931472
        %v596 = vadd.f32 %v576, %v593
        %v597 = vadd.f32 %v579, %v595
        %598 = vset.pattern.permute.xlu0 0
        %599 = vperm.xlu0 %598, %v572
        %v600 = vpop.permute.xlu0 %599
        %601 = vset.pattern.permute.xlu0 0
        %602 = vperm.xlu0 %601, %v573
        %v603 = vpop.permute.xlu0 %602
        %vm604 = vcmp.eq.s32.totalorder %v504, %v600
        %vm605 = vcmp.eq.s32.totalorder %v504, %v603
        %v606 = vsel %vm604, %v568, 0.0
        %v607 = vsel %vm605, %v570, 0.0
        %v608 = vsel %vm478, %v606, 0.0
        %609 = vadd.xlane.f32.xlu0 %v608
        %v610 = vpop.xlane.xlu0 %609
        %v611 = vsel %vm478, %v607, 0.0
        %612 = vadd.xlane.f32.xlu0 %v611
        %v613 = vpop.xlane.xlu0 %612
        %v614 = vsub.f32 %v596, %v610
        %v615 = vsub.f32 %v597, %v613
        %v616 = vmul.f32 %v433, %v614
        %v617 = vmul.f32 %v434, %v615
        %v618 = vsel %vm525, %v616, 0.0
        %v619 = vsel %vm525, %v617, 0.0
        %v620 = vadd.f32 %v618, %v619
        %621 = vadd.xlane.f32.xlu0 %v620
        %v622 = vpop.xlane.xlu0 %621
        %v623 = vrot.slane %v622, 4
        %v624 = vadd.f32 %v622, %v623
        %v625 = vrot.slane %v624, 2
        %v626 = vadd.f32 %v624, %v625
        %v627 = vrot.slane %v626, 1
        %v628 = vadd.f32 %v626, %v627
        %s629 = vtos %v628
        %s630 = sadd.f32 %s537, %s629
        %v631 = vstv %s630
        %vm632 = vcmask 0
        %633 = vst.msk [vmem:[%s410] sm:$0x1] %vm632, %v631
      $region56: #{tpu_custom_call.1} parent=47 // pred_fallthru
        _
      %p634 = scmp.lt.s32.totalorder %s39, 15
      %s635 = scalar_select %p634, %s39, 15
      %s636 = scalar_lea.vmem %s10, %s635
      // Predicated region
      $region57: #{tpu_custom_call.1} parent=47 // pred_check
        %p637 = pneg %p239
      $region58: #{tpu_custom_call.1} parent=47 // pred_check_branch
        %639 = sbr.rel (%p637) target = $region60
      $region59: #{tpu_custom_call.1} parent=47 // pred_region
        _
      $region60: #{tpu_custom_call.1} parent=47 // pred_fallthru
        _
    $region48: #{tpu_custom_call.1} parent=5 // pred_fallthru
      _
    %p640 = scmp.le.s32.totalorder 2, %s34
    // Predicated region
    $region61: #{tpu_custom_call.1} parent=5 // pred_check
      %p641 = pneg %p640
    $region62: #{tpu_custom_call.1} parent=5 // pred_check_branch
      %643 = sbr.rel (%p641) target = $region64
    $region63: #{tpu_custom_call.1} parent=5 // pred_region
      %s644 = ssub.s32 %s34, 2
      // Predicated region
      $region65: #{tpu_custom_call.1} parent=63 // pred_check
        %p645 = pneg %p245
      $region66: #{tpu_custom_call.1} parent=63 // pred_check_branch
        %647 = sbr.rel (%p645) target = $region68
      $region67: #{tpu_custom_call.1} parent=63 // pred_region
        %p648 = scmp.lt.s32.totalorder %s40, 15
        %s649 = scalar_select %p648, %s40, 15
        %s650 = scalar_lea.vmem %s10, %s649
      $region68: #{tpu_custom_call.1} parent=63 // pred_fallthru
        _
    $region64: #{tpu_custom_call.1} parent=5 // pred_fallthru
      _
  $region6: #{tpu_custom_call.1} parent=0 // loop_footer
    %s38 = sadd.s32 1, %s34
  $region7: #{tpu_custom_call.1} parent=0 // loop_footer_branch
    %33 = sbr.rel target = $region3
  $region8: #{tpu_custom_call.1} parent=0 // loop_exit
    _

</llo_original>
